<compile_context>
chip_gen: v5e
topology: v5e:2x2
jax: 0.10.0
libtpu: 0.0.40
codegen_flags: <defaults>
</compile_context>

<pallas_src>
import functools

import jax
import jax.numpy as jnp
from jax.experimental import pallas as pl
from jax.experimental.pallas import tpu as pltpu


D_PAD = 128    # lane-dense output width: v in lanes [0, D_out), -0.01*div in lane D_out
TB_CAP = 512   # max batch-tile rows per grid step


def velocity_div_kernel(x_ref, w1x_ref, bc_ref, w2p_ref, b2oh_ref, out_ref, *, scale):
    """One batch tile: MLP velocity field + exact divergence, lane-dense output.

    x_ref    : (TB, D_out)  VMEM  flattened coordinates for this batch tile
    w1x_ref  : (D_out, H)   VMEM  x-rows of W1 (resident; constant index_map)
    bc_ref   : (2, H)       row 0 = b1_eff = b1 + t * W1[t_row];  row 1 = c_k
    w2p_ref  : (H, 128)     W2 zero-padded to 128 output lanes
    b2oh_ref : (2, 128)     row 0 = b2 zero-padded; row 1 = one-hot at lane D_out
    out_ref  : (TB, 128)    lanes [0, D_out) = velocity, lane D_out = -scale*divergence
    """
    x = x_ref[...]                                               # (TB, D_out)
    b1_eff = bc_ref[0:1, :]                                      # (1, H)
    c = bc_ref[1:2, :]                                           # (1, H)

    h = jnp.tanh(jnp.dot(x, w1x_ref[...], preferred_element_type=jnp.float32) + b1_eff)

    # velocity into a 128-lane padded slab (extra columns of W2p / b2 row are zero)
    v_pad = (jnp.dot(h, w2p_ref[...], preferred_element_type=jnp.float32)
             + b2oh_ref[0:1, :])                                 # (TB, 128)

    # exact divergence: trace(W2^T diag(1 - h^2) W1_x) per sample
    negdiv = -scale * jnp.sum((1.0 - h * h) * c, axis=-1, keepdims=True)  # (TB, 1)

    # one-hot FMA epilogue: lane D_out of v_pad is exactly zero by construction
    out_ref[...] = v_pad + negdiv * b2oh_ref[1:2, :]


def prepare_params(params):
    """One-time parameter preprocessing, hoisted out of the per-ODE-step path."""
    W1, b1, W2, b2 = params
    H, D_out = W2.shape
    assert D_out + 1 <= D_PAD, (
        "divergence lane D_out must fit in the 128-lane output slab")

    W1x = W1[:D_out, :].astype(jnp.float32)                            # (D_out, H)
    w1t = W1[D_out:D_out + 1, :].astype(jnp.float32)                   # (1, H) t-row
    b1r = b1.reshape(1, -1).astype(jnp.float32)                        # (1, H)
    c = jnp.einsum("ik,ki->k", W1x, W2.astype(jnp.float32)).reshape(1, -1)   # (1, H)

    # per-call:  bc = bc_base + t * bc_t   (time feature folded into first-layer bias)
    bc_base = jnp.concatenate([b1r, c], axis=0)                        # (2, H)
    bc_t = jnp.concatenate([w1t, jnp.zeros_like(w1t)], axis=0)         # (2, H)

    W2p = jnp.zeros((H, D_PAD), jnp.float32).at[:, :D_out].set(W2.astype(jnp.float32))
    b2p = jnp.zeros((1, D_PAD), jnp.float32).at[:, :D_out].set(
        b2.reshape(1, -1).astype(jnp.float32))
    onehot = jnp.zeros((1, D_PAD), jnp.float32).at[0, D_out].set(1.0)
    b2oh = jnp.concatenate([b2p, onehot], axis=0)                      # (2, 128)

    return dict(W1x=W1x, bc_base=bc_base, bc_t=bc_t, W2p=W2p, b2oh=b2oh,
                D_out=D_out, H=H)


def _pick_batch_tile(B):
    """Largest useful batch tile (multiple of 8, <= TB_CAP); prefer divisors of B."""
    if B <= TB_CAP:
        return -(-B // 8) * 8              # one tile covers the whole batch
    cap = (TB_CAP // 8) * 8
    for tb in range(cap, 7, -8):           # prefer a tile that divides B (no jnp.pad)
        if B % tb == 0:
            return tb
    return cap


def ode_wrapper_forward(integration_time, x, dlogp, prepped, n_steps,
                        return_dlogp=True, reverse_ode=False):
    """Mirrors ODEWrapper.forward with return_dlogp=True."""
    del dlogp  # unused in the reference as well (states = (x, _))
    B, N, D = x.shape
    D_out = prepped["D_out"]
    H = prepped["H"]
    assert N * D == D_out

    # n_steps bookkeeping (Python-side, like the torch list append)
    n_steps.append(n_steps[-1] + 1)

    TB = _pick_batch_tile(B)
    B_pad = -(-B // TB) * TB

    x_flat = x.reshape(B, D_out).astype(jnp.float32)
    if B_pad != B:
        x_flat = jnp.pad(x_flat, ((0, B_pad - B), (0, 0)))

    # fold the time feature into the first-layer bias once per call (tiny XLA fma)
    t = jnp.asarray(integration_time, jnp.float32)
    bc = prepped["bc_base"] + t * prepped["bc_t"]                      # (2, H)

    kernel = functools.partial(velocity_div_kernel, scale=0.01)

    cost = pl.CostEstimate(
        flops=2 * B_pad * (D_out * H + H * D_PAD) + 5 * B_pad * H,
        transcendentals=B_pad * H,
        bytes_accessed=4 * (B_pad * D_out + D_out * H + 2 * H
                            + H * D_PAD + 2 * D_PAD + B_pad * D_PAD),
    )

    out = pl.pallas_call(
        kernel,
        out_shape=jax.ShapeDtypeStruct((B_pad, D_PAD), jnp.float32),
        grid_spec=pltpu.PrefetchScalarGridSpec(
            num_scalar_prefetch=0,
            grid=(B_pad // TB,),
            in_specs=[
                pl.BlockSpec((TB, D_out), lambda i: (i, 0)),     # x tile
                pl.BlockSpec((D_out, H), lambda i: (0, 0)),      # W1x (VMEM-resident)
                pl.BlockSpec((2, H), lambda i: (0, 0)),          # [b1_eff ; c]
                pl.BlockSpec((H, D_PAD), lambda i: (0, 0)),      # W2 padded
                pl.BlockSpec((2, D_PAD), lambda i: (0, 0)),      # [b2 padded ; one-hot]
            ],
            out_specs=pl.BlockSpec((TB, D_PAD), lambda i: (i, 0)),
        ),
        compiler_params=pltpu.CompilerParams(
            dimension_semantics=("parallel",)),
        cost_estimate=cost,
    )(x_flat, prepped["W1x"], bc, prepped["W2p"], prepped["b2oh"])

    b_out = out[:B, :D_out].reshape(B, N, D)
    neg_divergence = out[:B, D_out]

    if not reverse_ode:
        return b_out, neg_divergence
    else:
        return -b_out, -neg_divergence, n_steps


def ref_forward(integration_time, x, params):
    """Pure-JAX reference (autograd-exact divergence, matching compute_divergence)."""
    W1, b1, W2, b2 = params
    B, N, D = x.shape
    D_out = N * D
    x_flat = x.reshape(B, D_out)

    def vf(xi):
        ii = jnp.concatenate([xi, jnp.array([integration_time], dtype=jnp.float32)])
        h = jnp.tanh(ii @ W1 + b1)
        return h @ W2 + b2

    v = jax.vmap(vf)(x_flat)                                     # (B, D_out)
    J = jax.vmap(jax.jacfwd(vf))(x_flat)                         # (B, D_out, D_out)
    div = jnp.trace(J, axis1=1, axis2=2) * 0.01
    return v.reshape(B, N, D), -div


if __name__ == "__main__":
    B, N, D, H = 8, 8, 3, 64
    D_out = N * D
    D_in = D_out + 1

    key = jax.random.PRNGKey(0)
    kx, k1, k2, k3, k4 = jax.random.split(key, 5)

    x = jax.random.normal(kx, (B, N, D), dtype=jnp.float32)
    W1 = jax.random.normal(k1, (D_in, H), dtype=jnp.float32) * 0.3
    b1 = jax.random.normal(k2, (H,), dtype=jnp.float32) * 0.1
    W2 = jax.random.normal(k3, (H, D_out), dtype=jnp.float32) * 0.3
    b2 = jax.random.normal(k4, (D_out,), dtype=jnp.float32) * 0.1
    params = (W1, b1, W2, b2)

    # hoisted once per parameter set (not per ODE step)
    prepped = prepare_params(params)

    integration_time = jnp.float32(0.37)
    dlogp0 = jnp.zeros((B,), dtype=jnp.float32)
    n_steps = [0]

    b_out, neg_div = ode_wrapper_forward(integration_time, x, dlogp0, prepped, n_steps)
    jax.block_until_ready((b_out, neg_div))

    b_ref, neg_div_ref = ref_forward(integration_time, x, params)

    assert b_out.shape == (B, N, D)
    assert neg_div.shape == (B,)
    assert jnp.allclose(b_out, b_ref, rtol=1e-5, atol=1e-5)
    assert jnp.allclose(neg_div, neg_div_ref, rtol=1e-5, atol=1e-5)
    assert n_steps == [0, 1]

    # second check: batch size not a multiple of 8 (exercises the row-padding path)
    B2 = 10
    x2 = jax.random.normal(jax.random.PRNGKey(7), (B2, N, D), dtype=jnp.float32)
    dlogp2 = jnp.zeros((B2,), dtype=jnp.float32)
    b2_out, neg_div2 = ode_wrapper_forward(integration_time, x2, dlogp2, prepped,
                                           n_steps)
    jax.block_until_ready((b2_out, neg_div2))
    b2_ref, neg_div2_ref = ref_forward(integration_time, x2, params)
    assert jnp.allclose(b2_out, b2_ref, rtol=1e-5, atol=1e-5)
    assert jnp.allclose(neg_div2, neg_div2_ref, rtol=1e-5, atol=1e-5)

    print("KERNEL_OK")
</pallas_src>

<mosaic_0001>
module attributes {stable_mosaic.version = 11 : i64} {
  func.func @velocity_div_kernel(%arg0: i32, %arg1: memref<8x24xf32, #tpu.memory_space<vmem>>, %arg2: memref<24x64xf32, #tpu.memory_space<vmem>>, %arg3: memref<2x64xf32, #tpu.memory_space<vmem>>, %arg4: memref<64x128xf32, #tpu.memory_space<vmem>>, %arg5: memref<2x128xf32, #tpu.memory_space<vmem>>, %arg6: memref<8x128xf32, #tpu.memory_space<vmem>>) attributes {dimension_semantics = [#tpu.dimension_semantics<parallel>], iteration_bounds = array<i64: 1>, scalar_prefetch = 0 : i64, scratch_operands = 0 : i64, tpu.core_type = #tpu.core_type<tc>, window_params = [{transform_indices = @transform_0, window_bounds = array<i64: 8, 24>}, {pipeline_mode = #tpu.pipeline_mode<synchronous>, transform_indices = @transform_1, window_bounds = array<i64: 24, 64>}, {pipeline_mode = #tpu.pipeline_mode<synchronous>, transform_indices = @transform_2, window_bounds = array<i64: 2, 64>}, {pipeline_mode = #tpu.pipeline_mode<synchronous>, transform_indices = @transform_3, window_bounds = array<i64: 64, 128>}, {pipeline_mode = #tpu.pipeline_mode<synchronous>, transform_indices = @transform_4, window_bounds = array<i64: 2, 128>}, {transform_indices = @transform_5, window_bounds = array<i64: 8, 128>}]} {
    %c0 = arith.constant 0 : index
    %c0_0 = arith.constant 0 : index
    %0 = vector.load %arg1[%c0, %c0_0] : memref<8x24xf32, #tpu.memory_space<vmem>>, vector<8x24xf32>
    %c0_1 = arith.constant 0 : index
    %c0_2 = arith.constant 0 : index
    %1 = vector.load %arg3[%c0_1, %c0_2] : memref<2x64xf32, #tpu.memory_space<vmem>>, vector<1x64xf32>
    %c1 = arith.constant 1 : index
    %c0_3 = arith.constant 0 : index
    %2 = vector.load %arg3[%c1, %c0_3] : memref<2x64xf32, #tpu.memory_space<vmem>>, vector<1x64xf32>
    %c0_4 = arith.constant 0 : index
    %c0_5 = arith.constant 0 : index
    %3 = vector.load %arg2[%c0_4, %c0_5] : memref<24x64xf32, #tpu.memory_space<vmem>>, vector<24x64xf32>
    %cst = arith.constant dense<0.000000e+00> : vector<8x64xf32>
    %4 = tpu.matmul %0, %3, %cst {dimension_numbers = #tpu.dot_dimension_numbers<[1], [0], [0], [1], [0, 0, 1, 1], [], []>} : vector<8x24xf32>, vector<24x64xf32>, vector<8x64xf32> -> vector<8x64xf32>
    %5 = vector.broadcast %1 : vector<1x64xf32> to vector<8x64xf32>
    %6 = arith.addf %4, %5 : vector<8x64xf32>
    %7 = math.tanh %6 : vector<8x64xf32>
    %c0_6 = arith.constant 0 : index
    %c0_7 = arith.constant 0 : index
    %8 = vector.load %arg4[%c0_6, %c0_7] : memref<64x128xf32, #tpu.memory_space<vmem>>, vector<64x128xf32>
    %cst_8 = arith.constant dense<0.000000e+00> : vector<8x128xf32>
    %9 = tpu.matmul %7, %8, %cst_8 {dimension_numbers = #tpu.dot_dimension_numbers<[1], [0], [0], [1], [0, 0, 1, 1], [], []>} : vector<8x64xf32>, vector<64x128xf32>, vector<8x128xf32> -> vector<8x128xf32>
    %c0_9 = arith.constant 0 : index
    %c0_10 = arith.constant 0 : index
    %10 = vector.load %arg5[%c0_9, %c0_10] : memref<2x128xf32, #tpu.memory_space<vmem>>, vector<1x128xf32>
    %11 = vector.broadcast %10 : vector<1x128xf32> to vector<8x128xf32>
    %12 = arith.addf %9, %11 : vector<8x128xf32>
    %13 = arith.mulf %7, %7 : vector<8x64xf32>
    %cst_11 = arith.constant 1.000000e+00 : f32
    %14 = vector.broadcast %cst_11 : f32 to vector<8x64xf32>
    %15 = arith.subf %14, %13 : vector<8x64xf32>
    %16 = vector.broadcast %2 : vector<1x64xf32> to vector<8x64xf32>
    %17 = arith.mulf %15, %16 : vector<8x64xf32>
    %cst_12 = arith.constant dense<0.000000e+00> : vector<8xf32>
    %18 = vector.multi_reduction <add>, %17, %cst_12 [1] : vector<8x64xf32> to vector<8xf32>
    %19 = vector.shape_cast %18 : vector<8xf32> to vector<8x1xf32>
    %cst_13 = arith.constant -0.00999999977 : f32
    %20 = vector.broadcast %cst_13 : f32 to vector<8x1xf32>
    %21 = arith.mulf %20, %19 : vector<8x1xf32>
    %c1_14 = arith.constant 1 : index
    %c0_15 = arith.constant 0 : index
    %22 = vector.load %arg5[%c1_14, %c0_15] : memref<2x128xf32, #tpu.memory_space<vmem>>, vector<1x128xf32>
    %23 = vector.broadcast %21 : vector<8x1xf32> to vector<8x128xf32>
    %24 = vector.broadcast %22 : vector<1x128xf32> to vector<8x128xf32>
    %25 = arith.mulf %23, %24 : vector<8x128xf32>
    %26 = arith.addf %12, %25 : vector<8x128xf32>
    %c0_16 = arith.constant 0 : index
    %c0_17 = arith.constant 0 : index
    %27 = vector.load %arg6[%c0_16, %c0_17] : memref<8x128xf32, #tpu.memory_space<vmem>>, vector<8x128xf32>
    tpu.vector_store %arg6[%c0_16, %c0_17], %26 {strides = array<i32>} : memref<8x128xf32, #tpu.memory_space<vmem>>, vector<8x128xf32>,
    return
  }
  func.func @transform_0(%arg0: i32) -> (i32, i32) {
    %c0_i32 = arith.constant 0 : i32
    %c0_i32_0 = arith.constant 0 : i32
    return %arg0, %c0_i32 : i32, i32
  }
  func.func @transform_1(%arg0: i32) -> (i32, i32) {
    %c0_i32 = arith.constant 0 : i32
    %c0_i32_0 = arith.constant 0 : i32
    %c0_i32_1 = arith.constant 0 : i32
    return %c0_i32, %c0_i32_0 : i32, i32
  }
  func.func @transform_2(%arg0: i32) -> (i32, i32) {
    %c0_i32 = arith.constant 0 : i32
    %c0_i32_0 = arith.constant 0 : i32
    %c0_i32_1 = arith.constant 0 : i32
    return %c0_i32, %c0_i32_0 : i32, i32
  }
  func.func @transform_3(%arg0: i32) -> (i32, i32) {
    %c0_i32 = arith.constant 0 : i32
    %c0_i32_0 = arith.constant 0 : i32
    %c0_i32_1 = arith.constant 0 : i32
    return %c0_i32, %c0_i32_0 : i32, i32
  }
  func.func @transform_4(%arg0: i32) -> (i32, i32) {
    %c0_i32 = arith.constant 0 : i32
    %c0_i32_0 = arith.constant 0 : i32
    %c0_i32_1 = arith.constant 0 : i32
    return %c0_i32, %c0_i32_0 : i32, i32
  }
  func.func @transform_5(%arg0: i32) -> (i32, i32) {
    %c0_i32 = arith.constant 0 : i32
    %c0_i32_0 = arith.constant 0 : i32
    return %arg0, %c0_i32 : i32, i32
  }
}

</mosaic_0001>

<llo_original>
// kernel: tpu_custom_call.1
$region0: #{tpu_custom_call.1}
  #allocation0 [shape = 'u32[]', space=smem, size = 0x4, offset = 0x4, fixed_abs, tag = 'smem constant byte address 0x4 - core index']
  #allocation1 [shape = 'u32[72,128]{1,0:T(1,128)}', space=vmem, size = 0x9000, scoped, tag = 'internal scratch']
  %s0 = inlined_call_operand.hbm [shape: f32[8,24], index: 0, kind: input, shape index: {}]
  %s1 = inlined_call_operand.hbm [shape: f32[24,64], index: 1, kind: input, shape index: {}]
  %s2 = inlined_call_operand.hbm [shape: f32[2,64], index: 2, kind: input, shape index: {}]
  %s3 = inlined_call_operand.hbm [shape: f32[64,128], index: 3, kind: input, shape index: {}]
  %s4 = inlined_call_operand.vmem [shape: f32[2,128], index: 4, kind: input, shape index: {}]
  %s5 = inlined_call_operand.hbm [shape: f32[8,128], index: 5, kind: output, shape index: {}]
  %s6 = sld [smem:[#allocation0]]
  $region46: #{tpu_custom_call.1} parent=0
    _
  %s8 = ssub.s32 1, %s6
  %s9 = scalar_select 0, %s8, %s6
  $region1: #{tpu_custom_call.1} parent=0
    #allocation2 [shape = 'u8[4096]{0}', space=vmem, size = 0x1000, scoped, tag = 'input window, operand 0, single buffered']
    #allocation3 [shape = 's32[1]{0}', space=sflag, size = 0x4, scoped, tag = 'scoped memory for tpu_custom_call.1']
    #allocation4 [shape = 's32[1]{0}', space=sflag, size = 0x4, scoped, tag = 'scoped memory for tpu_custom_call.1']
    #allocation5 [shape = 'u8[12288]{0}', space=vmem, size = 0x3000, scoped, tag = 'input window, operand 1, single buffered']
    #allocation6 [shape = 's32[1]{0}', space=sflag, size = 0x4, scoped, tag = 'scoped memory for tpu_custom_call.1']
    #allocation7 [shape = 'u8[1024]{0}', space=vmem, size = 0x400, scoped, tag = 'input window, operand 2, single buffered']
    #allocation8 [shape = 'u8[32768]{0}', space=vmem, size = 0x8000, scoped, tag = 'input window, operand 3, single buffered']
    #allocation9 [shape = 's32[1]{0}', space=sflag, size = 0x4, scoped, tag = 'scoped memory for tpu_custom_call.1']
    #allocation10 [shape = 'u8[4096]{0}', space=vmem, size = 0x1000, scoped, tag = 'output window, operand 0, single buffered']
    %10 = vsyncpa [#allocation3], 0
    %11 = vsyncpa [#allocation6], 0
    %12 = vsyncpa [#allocation9], 0
    %13 = vsyncpa [#allocation4], 0
    // Predicated region
    $region2: #{tpu_custom_call.1} parent=1 // pred_check
      _
    $region3: #{tpu_custom_call.1} parent=1 // pred_check_branch
      %15 = sbr.rel (0) target = $region5
    $region4: #{tpu_custom_call.1} parent=1 // pred_region
      %17 = vsyncadd [#allocation3], 0
      %s19 = sshll.u32 %s0, 4
      %s20 = int_to_ptr.hbm [resolvable:$true] %s19
      %s21 = sshll.u32 [#allocation2], 4
      %s22 = int_to_ptr.vmem [resolvable:$true] %s21
      %24 = dma.hbm_to_vmem [thread:$0]  %s20, 128, %s22, [#allocation3]
    $region5: #{tpu_custom_call.1} parent=1 // pred_fallthru
      _
    // Predicated region
    $region6: #{tpu_custom_call.1} parent=1 // pred_check
      _
    $region7: #{tpu_custom_call.1} parent=1 // pred_check_branch
      %26 = sbr.rel (0) target = $region9
    $region8: #{tpu_custom_call.1} parent=1 // pred_region
      %28 = vsyncadd [#allocation6], 0
      %s29 = sshll.u32 %s1, 4
      %s30 = int_to_ptr.hbm [resolvable:$true] %s29
      %s31 = sshll.u32 [#allocation5], 4
      %s32 = int_to_ptr.vmem [resolvable:$true] %s31
      %37 = dma.hbm_to_vmem [thread:$0]  %s30, 384, %s32, [#allocation6], 128, 128, 8
    $region9: #{tpu_custom_call.1} parent=1 // pred_fallthru
      _
    // Predicated region
    $region10: #{tpu_custom_call.1} parent=1 // pred_check
      _
    $region11: #{tpu_custom_call.1} parent=1 // pred_check_branch
      %39 = sbr.rel (0) target = $region13
    $region12: #{tpu_custom_call.1} parent=1 // pred_region
      %41 = vsyncadd [#allocation6], 0
      %s43 = sshll.u32 %s2, 4
      %s44 = int_to_ptr.hbm [resolvable:$true] %s43
      %s45 = sshll.u32 [#allocation7], 4
      %s46 = int_to_ptr.vmem [resolvable:$true] %s45
      %48 = dma.hbm_to_vmem [thread:$0]  %s44, 32, %s46, [#allocation6]
    $region13: #{tpu_custom_call.1} parent=1 // pred_fallthru
      _
    // Predicated region
    $region14: #{tpu_custom_call.1} parent=1 // pred_check
      _
    $region15: #{tpu_custom_call.1} parent=1 // pred_check_branch
      %50 = sbr.rel (0) target = $region17
    $region16: #{tpu_custom_call.1} parent=1 // pred_region
      %52 = vsyncadd [#allocation9], 0
      %s53 = sshll.u32 %s3, 4
      %s54 = int_to_ptr.hbm [resolvable:$true] %s53
      %s55 = sshll.u32 [#allocation8], 4
      %s56 = int_to_ptr.vmem [resolvable:$true] %s55
      %61 = dma.hbm_to_vmem [thread:$0]  %s54, 1024, %s56, [#allocation9], 128, 128, 8
    $region17: #{tpu_custom_call.1} parent=1 // pred_fallthru
      _
    // Predicated region
    $region18: #{tpu_custom_call.1} parent=1 // pred_check
      _
    $region19: #{tpu_custom_call.1} parent=1 // pred_check_branch
      %63 = sbr.rel (0) target = $region21
    $region20: #{tpu_custom_call.1} parent=1 // pred_region
      _
    $region21: #{tpu_custom_call.1} parent=1 // pred_fallthru
      _
    // Predicated region
    $region22: #{tpu_custom_call.1} parent=1 // pred_check
      _
    $region23: #{tpu_custom_call.1} parent=1 // pred_check_branch
      %65 = sbr.rel (0) target = $region25
    $region24: #{tpu_custom_call.1} parent=1 // pred_region
      %67 = dma.done [#allocation3], 128
    $region25: #{tpu_custom_call.1} parent=1 // pred_fallthru
      _
    // Predicated region
    $region26: #{tpu_custom_call.1} parent=1 // pred_check
      _
    $region27: #{tpu_custom_call.1} parent=1 // pred_check_branch
      %69 = sbr.rel (0) target = $region29
    $region28: #{tpu_custom_call.1} parent=1 // pred_region
      %71 = dma.done [#allocation6], 384
    $region29: #{tpu_custom_call.1} parent=1 // pred_fallthru
      _
    // Predicated region
    $region30: #{tpu_custom_call.1} parent=1 // pred_check
      _
    $region31: #{tpu_custom_call.1} parent=1 // pred_check_branch
      %73 = sbr.rel (0) target = $region33
    $region32: #{tpu_custom_call.1} parent=1 // pred_region
      %75 = dma.done [#allocation6], 32
    $region33: #{tpu_custom_call.1} parent=1 // pred_fallthru
      _
    // Predicated region
    $region34: #{tpu_custom_call.1} parent=1 // pred_check
      _
    $region35: #{tpu_custom_call.1} parent=1 // pred_check_branch
      %77 = sbr.rel (0) target = $region37
    $region36: #{tpu_custom_call.1} parent=1 // pred_region
      %79 = dma.done [#allocation9], 1024
    $region37: #{tpu_custom_call.1} parent=1 // pred_fallthru
      _
    %v80 = vld [vmem:[#allocation2] sm:$0xff]
    %v81 = vld [vmem:[#allocation7] sm:$0x1]
    %v82 = vld [vmem:[#allocation7 + $0x1] sm:$0x1]
    %v83 = vld [vmem:[#allocation5] sm:$0xff]
    %v84 = vld [vmem:[#allocation5 + $0x8] sm:$0xff]
    %v85 = vld [vmem:[#allocation5 + $0x10] sm:$0xff]
    %v86 = vperm.slane %v81, 0
    %vm87 = vcmask 195584
    %v89 = vsel %vm87, %v80, 0
    %91 = vmatpush.msra.mxu0 0.0
    %92 = vmatpush.msra.mxu0 0.0
    %93 = vmatpush.msra.mxu0 0.0
    %94 = vmatpush.msra.mxu0 0.0
    %95 = vmatpush.msra.mxu0 0.0
    %96 = vmatpush.msra.mxu0 0.0
    %97 = vmatpush.msra.mxu0 0.0
    %98 = vmatpush.msra.mxu0 0.0
    %99 = vmatpush.msra.mxu0 0.0
    %100 = vmatpush.msra.mxu0 0.0
    %101 = vmatpush.msra.mxu0 0.0
    %102 = vmatpush.msra.mxu0 0.0
    %103 = vmatpush.msra.mxu0 0.0
    %104 = vmatpush.msra.mxu0 %v85
    %105 = vmatpush.msra.mxu0 %v84
    %106 = vmatpush.msra.mxu0 %v83
    %107 = vmatmul.f32.gmra.mxu0 %v89
    %v108 = vpop.f32.mrf.mxu0
    %v109 = vadd.f32 %v86, %v108
    %110 = vdwg.mxu0
    %v111 = vtanh.pop %v109
    %v112 = vld [vmem:[#allocation8] sm:$0xff]
    %v113 = vld [vmem:[#allocation8 + $0x8] sm:$0xff]
    %v114 = vld [vmem:[#allocation8 + $0x10] sm:$0xff]
    %v115 = vld [vmem:[#allocation8 + $0x18] sm:$0xff]
    %v116 = vld [vmem:[#allocation8 + $0x20] sm:$0xff]
    %v117 = vld [vmem:[#allocation8 + $0x28] sm:$0xff]
    %v118 = vld [vmem:[#allocation8 + $0x30] sm:$0xff]
    %v119 = vld [vmem:[#allocation8 + $0x38] sm:$0xff]
    %v120 = vld [vmem:[%s4] sm:$0x1]
    %v121 = vperm.slane %v120, 0
    %vm122 = vcmask 523264
    %v124 = vsel %vm122, %v111, 0
    %126 = vmatpush.msra.mxu0 0.0
    %127 = vmatpush.msra.mxu0 0.0
    %128 = vmatpush.msra.mxu0 0.0
    %129 = vmatpush.msra.mxu0 0.0
    %130 = vmatpush.msra.mxu0 0.0
    %131 = vmatpush.msra.mxu0 0.0
    %132 = vmatpush.msra.mxu0 0.0
    %133 = vmatpush.msra.mxu0 0.0
    %134 = vmatpush.msra.mxu0 %v119
    %135 = vmatpush.msra.mxu0 %v118
    %136 = vmatpush.msra.mxu0 %v117
    %137 = vmatpush.msra.mxu0 %v116
    %138 = vmatpush.msra.mxu0 %v115
    %139 = vmatpush.msra.mxu0 %v114
    %140 = vmatpush.msra.mxu0 %v113
    %141 = vmatpush.msra.mxu0 %v112
    %142 = vmatmul.f32.gmra.mxu0 %v124
    %v143 = vpop.f32.mrf.mxu0
    %v144 = vadd.f32 %v121, %v143
    %145 = vdwg.mxu0
    %v146 = vmul.f32 %v111, %v111
    %v147 = vsub.f32 1.0, %v146
    %v148 = vperm.slane %v82, 0
    %v149 = vmul.f32 %v147, %v148
    %v150 = vsel %vm122, %v149, 0.0
    %151 = vadd.xlane.f32.xlu0 %v150
    %v152 = vpop.xlane.xlu0 %151
    %v153 = vmul.f32 %v152, -0.01
    %v154 = vld [vmem:[%s4 + $0x1] sm:$0x1]
    %v155 = vperm.slane %v154, 0
    %v156 = vmul.f32 %v153, %v155
    %v157 = vadd.f32 %v144, %v156
    %158 = vst [vmem:[#allocation10] sm:$0xff] %v157
    // Predicated region
    $region38: #{tpu_custom_call.1} parent=1 // pred_check
      _
    $region39: #{tpu_custom_call.1} parent=1 // pred_check_branch
      %160 = sbr.rel (0) target = $region41
    $region40: #{tpu_custom_call.1} parent=1 // pred_region
      %162 = vsyncadd [#allocation4], 0
      %s164 = sshll.u32 [#allocation10], 4
      %s165 = int_to_ptr.vmem [resolvable:$true] %s164
      %s166 = sshll.u32 %s5, 4
      %s167 = int_to_ptr.hbm [resolvable:$true] %s166
      %169 = dma.vmem_to_hbm [thread:$0]  %s165, 128, %s167, [#allocation4]
    $region41: #{tpu_custom_call.1} parent=1 // pred_fallthru
      _
    // Predicated region
    $region42: #{tpu_custom_call.1} parent=1 // pred_check
      _
    $region43: #{tpu_custom_call.1} parent=1 // pred_check_branch
      %171 = sbr.rel (0) target = $region45
    $region44: #{tpu_custom_call.1} parent=1 // pred_region
      %173 = dma.done [#allocation4], 128
    $region45: #{tpu_custom_call.1} parent=1 // pred_fallthru
      _
    %174 = vsyncpa [#allocation3], 1
    %175 = vsyncpa [#allocation6], 1
    %176 = vsyncpa [#allocation9], 1
    %177 = vsyncpa [#allocation4], 1

</llo_original>
